<compile_context>
chip_gen: v7x
topology: tpu7x:2x2x1
jax: 0.10.0
libtpu: 0.0.40
codegen_flags: <defaults>
</compile_context>

<pallas_src>
import jax
import jax.numpy as jnp
from jax.experimental import pallas as pl
from jax.experimental.pallas import tpu as pltpu


def _round_up(x, m):
    return ((x + m - 1) // m) * m


def _wordemb_kernel(ids_ref, emb_hbm, w_ref, b_ref, out_ref, embs_vmem, sem):
    # ids_ref:  SMEM (N_pad,) int32     token ids, (seq, batch) flattened order
    # emb_hbm:  HBM  (V, E) f32         embedding table (raw ref, manual DMA)
    # w_ref:    VMEM (E, H_pad) f32     projection weight (pre-transposed, padded)
    # b_ref:    VMEM (1, H_pad) f32     projection bias (padded)
    # out_ref:  VMEM (TILE_N, H_pad) f32
    # embs_vmem:VMEM (TILE_N, E) f32    gathered embedding rows
    # sem:      DMA semaphore
    tile = pl.program_id(0)
    tile_n, _ = embs_vmem.shape
    voc = emb_hbm.shape[0]
    base = tile * tile_n

    # Row gather: one DMA per token; the table never enters VMEM wholesale.
    @pl.loop(0, tile_n)
    def _(r):
        tok = ids_ref[base + r]
        tok = jnp.minimum(jnp.maximum(tok, 0), voc - 1)   # guard OOB ids
        pltpu.make_async_copy(emb_hbm.at[pl.ds(tok, 1), :],
                              embs_vmem.at[pl.ds(r, 1), :],
                              sem).start()

    # All copies are identically sized -> tile_n waits on the same semaphore.
    @pl.loop(0, tile_n)
    def _(r):
        pltpu.make_async_copy(emb_hbm.at[pl.ds(0, 1), :],
                              embs_vmem.at[pl.ds(0, 1), :],
                              sem).wait()

    # Fused projection on the MXU, lane-dense (H_pad multiple of 128) store.
    out_ref[...] = (jnp.dot(embs_vmem[...], w_ref[...],
                            preferred_element_type=jnp.float32)
                    + b_ref[...])


def word_emb_forward(sentences, emb_table, w_eh, b_h, *, tile_n=256):
    """sentences: (B, S) int -> (S, B, H) f32 (matches the torch module's
    non-LSTM forward, which does NOT transpose back).

    w_eh is the projection weight already transposed to (E, H) — the transpose
    is hoisted out of the per-call path (see param prep in __main__)."""
    B, S = sentences.shape
    V, E = emb_table.shape
    E2, H = w_eh.shape
    assert E2 == E
    N = S * B

    # Lane-dense output: pad H up to a multiple of 128 (avoids masked vst).
    H_pad = _round_up(H, 128)
    if H_pad != H:
        w_p = jnp.zeros((E, H_pad), w_eh.dtype).at[:, :H].set(w_eh)
        b_p = jnp.zeros((H_pad,), b_h.dtype).at[:H].set(b_h)
    else:
        w_p, b_p = w_eh, b_h
    b_p = b_p.reshape(1, H_pad)

    # Token tile: multiple of 8, no larger than the (8-rounded) token count.
    tile_n = max(8, min(_round_up(tile_n, 8), _round_up(N, 8)))
    N_pad = _round_up(N, tile_n)

    # transpose(0,1) of the embedded tensor == gathering ids in (S, B) order.
    ids = jnp.transpose(sentences).reshape(N).astype(jnp.int32)
    if N_pad != N:
        ids = jnp.pad(ids, (0, N_pad - N))

    grid = (N_pad // tile_n,)

    # Explicit VMEM budget: double-buffered out tiles + resident W/b + gather scratch.
    vmem_needed = (2 * tile_n * H_pad * 4
                   + 2 * E * H_pad * 4
                   + 2 * H_pad * 4
                   + tile_n * E * 4)
    vmem_limit = int(min(max(2 * vmem_needed, 8 << 20), 48 << 20))

    out = pl.pallas_call(
        _wordemb_kernel,
        out_shape=jax.ShapeDtypeStruct((N_pad, H_pad), jnp.float32),
        grid_spec=pltpu.PrefetchScalarGridSpec(
            num_scalar_prefetch=1,          # ids -> SMEM, drives the DMA gather
            grid=grid,
            in_specs=[
                pl.BlockSpec(memory_space=pl.ANY),                 # emb table, HBM
                pl.BlockSpec((E, H_pad), lambda i, ids: (0, 0)),   # W, resident
                pl.BlockSpec((1, H_pad), lambda i, ids: (0, 0)),   # bias, resident
            ],
            out_specs=pl.BlockSpec((tile_n, H_pad), lambda i, ids: (i, 0)),
            scratch_shapes=[
                pltpu.VMEM((tile_n, E), jnp.float32),
                pltpu.SemaphoreType.DMA(()),
            ],
        ),
        compiler_params=pltpu.CompilerParams(
            dimension_semantics=("parallel",),
            vmem_limit_bytes=vmem_limit,
        ),
    )(ids, emb_table, w_p, b_p)

    return out[:N, :H].reshape(S, B, H)


def _init_params(key, voc_size, emb_size, hidden_size):
    k_emb, k_w, k_b = jax.random.split(key, 3)
    # nn.Embedding weight re-initialized uniform(-r, r), r = 0.5 / voc_size
    r = 0.5 / voc_size
    emb_table = jax.random.uniform(k_emb, (voc_size, emb_size),
                                   jnp.float32, minval=-r, maxval=r)
    # nn.Linear default init: uniform(-1/sqrt(fan_in), 1/sqrt(fan_in)), torch layout (H, E)
    bound = 1.0 / (emb_size ** 0.5)
    proj_w = jax.random.uniform(k_w, (hidden_size, emb_size),
                                jnp.float32, minval=-bound, maxval=bound)
    proj_b = jax.random.uniform(k_b, (hidden_size,),
                                jnp.float32, minval=-bound, maxval=bound)
    return emb_table, proj_w, proj_b


if __name__ == "__main__":
    voc_size, emb_size, hidden_size = 64, 32, 32
    batch, seq = 2, 8

    key = jax.random.PRNGKey(0)
    k_params, k_ids = jax.random.split(key)
    emb_table, proj_w, proj_b = _init_params(k_params, voc_size, emb_size,
                                             hidden_size)
    sentences = jax.random.randint(k_ids, (batch, seq), 0, voc_size,
                                   dtype=jnp.int32)

    # Hoisted one-time param prep (not per-forward): torch (H, E) -> (E, H).
    proj_w_t = jnp.transpose(proj_w)

    out = word_emb_forward(sentences, emb_table, proj_w_t, proj_b)
    out = jax.block_until_ready(out)

    # Pure-JAX reference of the same forward.
    embs_ref = jnp.transpose(emb_table[sentences], (1, 0, 2))   # (S, B, E)
    ref = embs_ref @ proj_w_t + proj_b                          # (S, B, H)

    assert out.shape == (seq, batch, hidden_size)
    assert jnp.allclose(out, ref, atol=1e-5, rtol=1e-5)
    print("KERNEL_OK")
</pallas_src>

<mosaic_0001>
module attributes {stable_mosaic.version = 11 : i64} {
  func.func @_wordemb_kernel(%arg0: i32, %arg1: memref<16xi32, #tpu.memory_space<smem>>, %arg2: memref<64x32xf32, #tpu.memory_space<any>>, %arg3: memref<32x128xf32, #tpu.memory_space<vmem>>, %arg4: memref<1x128xf32, #tpu.memory_space<vmem>>, %arg5: memref<16x128xf32, #tpu.memory_space<vmem>>, %arg6: memref<16x32xf32, #tpu.memory_space<vmem>>, %arg7: memref<!tpu.dma_semaphore, #tpu.memory_space<semaphore_mem>>) attributes {dimension_semantics = [#tpu.dimension_semantics<parallel>], iteration_bounds = array<i64: 1>, scalar_prefetch = 1 : i64, scratch_operands = 2 : i64, tpu.core_type = #tpu.core_type<tc>, window_params = [{}, {pipeline_mode = #tpu.pipeline_mode<synchronous>, transform_indices = @transform_1, window_bounds = array<i64: 32, 128>}, {pipeline_mode = #tpu.pipeline_mode<synchronous>, transform_indices = @transform_2, window_bounds = array<i64: 1, 128>}, {transform_indices = @transform_3, window_bounds = array<i64: 16, 128>}]} {
    %c16_i32 = arith.constant 16 : i32
    %0 = arith.muli %arg0, %c16_i32 : i32
    %c0_i32 = arith.constant 0 : i32
    %c16_i32_0 = arith.constant 16 : i32
    %1 = arith.addi %c0_i32, %c16_i32_0 : i32
    %c1_i32 = arith.constant 1 : i32
    scf.for %arg8 = %c0_i32 to %1 step %c1_i32  : i32 {
      %c1_i32_12 = arith.constant 1 : i32
      %10 = arith.muli %arg8, %c1_i32_12 : i32
      %c0_i32_13 = arith.constant 0 : i32
      %11 = arith.addi %c0_i32_13, %10 : i32
      %12 = arith.addi %0, %11 : i32
      %13 = arith.index_cast %12 : i32 to index
      %14 = memref.load %arg1[%13] : memref<16xi32, #tpu.memory_space<smem>>
      %c0_i32_14 = arith.constant 0 : i32
      %15 = arith.maxsi %14, %c0_i32_14 : i32
      %c63_i32 = arith.constant 63 : i32
      %16 = arith.minsi %15, %c63_i32 : i32
      %c0_i32_15 = arith.constant 0 : i32
      %17 = tpu.memref_slice %arg2[%16, %c0_i32_15] : memref<64x32xf32, #tpu.memory_space<any>> -> memref<1x32xf32, #tpu.memory_space<any>>
      %c0_i32_16 = arith.constant 0 : i32
      %18 = tpu.memref_slice %arg6[%11, %c0_i32_16] : memref<16x32xf32, #tpu.memory_space<vmem>> -> memref<1x32xf32, #tpu.memory_space<vmem>>
      tpu.enqueue_dma source(%17 : memref<1x32xf32, #tpu.memory_space<any>>) target(%18 : memref<1x32xf32, #tpu.memory_space<vmem>>) target_semaphore(%arg7 : memref<!tpu.dma_semaphore, #tpu.memory_space<semaphore_mem>>)
    }
    %c16_i32_1 = arith.constant 16 : i32
    %c0_i32_2 = arith.constant 0 : i32
    %c16_i32_3 = arith.constant 16 : i32
    %2 = arith.addi %c0_i32_2, %c16_i32_3 : i32
    %c1_i32_4 = arith.constant 1 : i32
    scf.for %arg8 = %c0_i32_2 to %2 step %c1_i32_4  : i32 {
      %c0_i32_12 = arith.constant 0 : i32
      %c0_i32_13 = arith.constant 0 : i32
      %10 = tpu.memref_slice %arg2[%c0_i32_12, %c0_i32_13] : memref<64x32xf32, #tpu.memory_space<any>> -> memref<1x32xf32, #tpu.memory_space<any>>
      %c0_i32_14 = arith.constant 0 : i32
      %c0_i32_15 = arith.constant 0 : i32
      %11 = tpu.memref_slice %arg6[%c0_i32_14, %c0_i32_15] : memref<16x32xf32, #tpu.memory_space<vmem>> -> memref<1x32xf32, #tpu.memory_space<vmem>>
      tpu.wait_dma2 semaphore(%arg7 : memref<!tpu.dma_semaphore, #tpu.memory_space<semaphore_mem>>) src(%10 : memref<1x32xf32, #tpu.memory_space<any>>) dst(%11 : memref<1x32xf32, #tpu.memory_space<vmem>>)
    }
    %c0 = arith.constant 0 : index
    %c0_5 = arith.constant 0 : index
    %3 = vector.load %arg6[%c0, %c0_5] : memref<16x32xf32, #tpu.memory_space<vmem>>, vector<16x32xf32>
    %c0_6 = arith.constant 0 : index
    %c0_7 = arith.constant 0 : index
    %4 = vector.load %arg3[%c0_6, %c0_7] : memref<32x128xf32, #tpu.memory_space<vmem>>, vector<32x128xf32>
    %cst = arith.constant dense<0.000000e+00> : vector<16x128xf32>
    %5 = tpu.matmul %3, %4, %cst {dimension_numbers = #tpu.dot_dimension_numbers<[1], [0], [0], [1], [0, 0, 1, 1], [], []>} : vector<16x32xf32>, vector<32x128xf32>, vector<16x128xf32> -> vector<16x128xf32>
    %c0_8 = arith.constant 0 : index
    %c0_9 = arith.constant 0 : index
    %6 = vector.load %arg4[%c0_8, %c0_9] : memref<1x128xf32, #tpu.memory_space<vmem>>, vector<1x128xf32>
    %7 = vector.broadcast %6 : vector<1x128xf32> to vector<16x128xf32>
    %8 = arith.addf %5, %7 : vector<16x128xf32>
    %c0_10 = arith.constant 0 : index
    %c0_11 = arith.constant 0 : index
    %9 = vector.load %arg5[%c0_10, %c0_11] : memref<16x128xf32, #tpu.memory_space<vmem>>, vector<16x128xf32>
    tpu.vector_store %arg5[%c0_10, %c0_11], %8 {strides = array<i32>} : memref<16x128xf32, #tpu.memory_space<vmem>>, vector<16x128xf32>,
    return
  }
  func.func @transform_1(%arg0: i32, %arg1: memref<16xi32, #tpu.memory_space<smem>>) -> (i32, i32) {
    %c0_i32 = arith.constant 0 : i32
    %c0_i32_0 = arith.constant 0 : i32
    %c0_i32_1 = arith.constant 0 : i32
    return %c0_i32, %c0_i32_0 : i32, i32
  }
  func.func @transform_2(%arg0: i32, %arg1: memref<16xi32, #tpu.memory_space<smem>>) -> (i32, i32) {
    %c0_i32 = arith.constant 0 : i32
    %c0_i32_0 = arith.constant 0 : i32
    %c0_i32_1 = arith.constant 0 : i32
    return %c0_i32, %c0_i32_0 : i32, i32
  }
  func.func @transform_3(%arg0: i32, %arg1: memref<16xi32, #tpu.memory_space<smem>>) -> (i32, i32) {
    %c0_i32 = arith.constant 0 : i32
    %c0_i32_0 = arith.constant 0 : i32
    return %arg0, %c0_i32 : i32, i32
  }
}

</mosaic_0001>

<llo_original>
// kernel: tpu_custom_call.1
$region0: #{tpu_custom_call.1}
  #allocation0 [shape = 'u32[]', space=smem, size = 0x4, offset = 0x4, fixed_abs, tag = 'smem constant byte address 0x4 - core index']
  #allocation1 [shape = 'u32[144,128]{1,0:T(1,128)}', space=vmem, size = 0x12000, scoped, tag = 'internal scratch']
  #allocation2 [shape = 'f32[16,32]{1,0:T(8,128)}', space=vmem, size = 0x2000, scoped, tag = 'scratch operand']
  #allocation3 [shape = 's32[1]{0}', space=sflag, size = 0x4, scoped, tag = 'scratch operand']
  #allocation4 [shape = 's32[1]{0}', space=sflag, size = 0x4, scoped, tag = 'scoped memory for tpu_custom_call.1']
  #allocation5 [shape = 'u8[512]{0}', space=smem, size = 0x200, scoped, tag = 'prefetched SMEM operand 0']
  #allocation8 [shape = 's32[]', space=sflag, size = 0x4, offset = 0, fixed_abs, tag = 'sflag constant byte address 0x0 - dummy sync flag']
  %s0 = inlined_call_operand.vmem [shape: s32[16], index: 0, kind: input, shape index: {}]
  %s1 = inlined_call_operand.vmem [shape: f32[64,32], index: 1, kind: input, shape index: {}]
  %s2 = inlined_call_operand.vmem [shape: f32[32,128], index: 2, kind: input, shape index: {}]
  %s3 = inlined_call_operand.vmem [shape: f32[1,128], index: 3, kind: input, shape index: {}]
  %s4 = inlined_call_operand.hbm [shape: f32[16,128], index: 4, kind: output, shape index: {}]
  %s5 = sld [smem:[#allocation0]]
  $region62: #{tpu_custom_call.1} parent=0
    _
  %s7 = ssub.s32 1, %s5
  %s8 = scalar_select 0, %s7, %s5
  %s9 = sshll.u32 %s0, 4
  %s10 = int_to_ptr.vmem [resolvable:$true] %s9
  %12 = dma.vmem_to_smem %s10, 16, [#allocation5], [#allocation4]
  %13 = dma.done [#allocation4], 16
  %14 = sfence
  $region1: #{tpu_custom_call.1} parent=0
    #allocation6 [shape = 'u8[8192]{0}', space=vmem, size = 0x2000, scoped, tag = 'output window, operand 0, single buffered']
    #allocation7 [shape = 's32[1]{0}', space=sflag, size = 0x4, scoped, tag = 'scoped memory for tpu_custom_call.1']
    %15 = vsyncpa [#allocation7], 0
    // Predicated region
    $region2: #{tpu_custom_call.1} parent=1 // pred_check
      _
    $region3: #{tpu_custom_call.1} parent=1 // pred_check_branch
      %17 = sbr.rel (0) target = $region5
    $region4: #{tpu_custom_call.1} parent=1 // pred_region
      _
    $region5: #{tpu_custom_call.1} parent=1 // pred_fallthru
      _
    // Predicated region
    $region6: #{tpu_custom_call.1} parent=1 // pred_check
      _
    $region7: #{tpu_custom_call.1} parent=1 // pred_check_branch
      %19 = sbr.rel (0) target = $region9
    $region8: #{tpu_custom_call.1} parent=1 // pred_region
      _
    $region9: #{tpu_custom_call.1} parent=1 // pred_fallthru
      _
    %s20 = smul.u32 0, 16
    loop: start=0, step=1, limit=16
    $region10: #{tpu_custom_call.1} parent=1 // loop_pre_header
      _
    $region11: #{tpu_custom_call.1} parent=1 // loop_header
      %s22 = sphi 0, %s26
      %p23 = scmp.ge.s32.totalorder %s22, 16
    $region12: #{tpu_custom_call.1} parent=1 // loop_header_branch
      %25 = sbr.rel (%p23) target = $region16
    $region13: #{tpu_custom_call.1} parent=1 // loop_body
      %s27 = sadd.s32 %s20, %s22
      %s28 = sld [smem:[#allocation5 + %s27]]
      %p29 = scmp.gt.s32.totalorder %s28, 0
      %s30 = scalar_select %p29, %s28, 0
      %p31 = scmp.lt.s32.totalorder %s30, 63
      %s32 = scalar_select %p31, %s30, 63
      %s33 = scalar_lea.vmem %s1, %s32
      %s34 = scalar_lea.vmem [#allocation2], %s22
      %p36 = scmp.lt.u32.totalorder 1, 8
      %p37 = pneg %p36
      // Predicated region
      $region17: #{tpu_custom_call.1} parent=13 // pred_check
        _
      $region18: #{tpu_custom_call.1} parent=13 // pred_check_branch
        %39 = sbr.rel (%p36) target = $region20
      $region19: #{tpu_custom_call.1} parent=13 // pred_region
        %s54 = sand.u32 1, 7
        %p55 = scmp.eq.s32.totalorder %s54, 0
        %p56 = pneg %p55
        // Predicated region
        $region32: #{tpu_custom_call.1} parent=19 // pred_check
          _
        $region33: #{tpu_custom_call.1} parent=19 // pred_check_branch
          %58 = sbr.rel (%p55) target = $region35
        $region34: #{tpu_custom_call.1} parent=19 // pred_region
          %s59 = sand.u32 1, 7
          %s60 = ssub.s32 1, %s59
          %s61 = scalar_lea.vmem %s33, %s60
          %s62 = ssub.s32 1, %s59
          %s63 = scalar_lea.vmem %s34, %s62 [#allocation2]
          %s64 = sshllo.u32 0, %s59
          loop: start=0, step=1, limit=1
          $region36: #{tpu_custom_call.1} parent=34 // loop_pre_header
            _
          $region37: #{tpu_custom_call.1} parent=34 // loop_header
            %s66 = sphi 0, %s70
            %p67 = scmp.ge.s32.totalorder %s66, 1
            %s71 = sphi %s61, %s61
            %s72 = sphi %s63, %s63
          $region38: #{tpu_custom_call.1} parent=34 // loop_header_branch
            %69 = sbr.rel (%p67) target = $region42
          $region39: #{tpu_custom_call.1} parent=34 // loop_body
            %v73 = vld [vmem:[%s71] sm:%s64]
            %74 = vst [vmem:[%s72] sm:%s64] %v73
          $region40: #{tpu_custom_call.1} parent=34 // loop_footer
            %s70 = sadd.s32 1, %s66
          $region41: #{tpu_custom_call.1} parent=34 // loop_footer_branch
            %65 = sbr.rel target = $region37
          $region42: #{tpu_custom_call.1} parent=34 // loop_exit
            _
        $region35: #{tpu_custom_call.1} parent=19 // pred_fallthru
          _
      $region20: #{tpu_custom_call.1} parent=13 // pred_fallthru
        _
      // Predicated region
      $region21: #{tpu_custom_call.1} parent=13 // pred_check
        %p40 = pneg %p36
      $region22: #{tpu_custom_call.1} parent=13 // pred_check_branch
        %42 = sbr.rel (%p40) target = $region24
      $region23: #{tpu_custom_call.1} parent=13 // pred_region
        %s43 = sshllo.u32 0, 1
        loop: start=0, step=1, limit=1
        $region25: #{tpu_custom_call.1} parent=23 // loop_pre_header
          _
        $region26: #{tpu_custom_call.1} parent=23 // loop_header
          %s45 = sphi 0, %s49
          %p46 = scmp.ge.s32.totalorder %s45, 1
          %s50 = sphi %s33, %s33
          %s51 = sphi %s34, %s34
        $region27: #{tpu_custom_call.1} parent=23 // loop_header_branch
          %48 = sbr.rel (%p46) target = $region31
        $region28: #{tpu_custom_call.1} parent=23 // loop_body
          %v52 = vld [vmem:[%s50] sm:%s43]
          %53 = vst [vmem:[%s51] sm:%s43] %v52
        $region29: #{tpu_custom_call.1} parent=23 // loop_footer
          %s49 = sadd.s32 1, %s45
        $region30: #{tpu_custom_call.1} parent=23 // loop_footer_branch
          %44 = sbr.rel target = $region26
        $region31: #{tpu_custom_call.1} parent=23 // loop_exit
          _
      $region24: #{tpu_custom_call.1} parent=13 // pred_fallthru
        _
      // Predicated region
      $region43: #{tpu_custom_call.1} parent=13 // pred_check
        _
      $region44: #{tpu_custom_call.1} parent=13 // pred_check_branch
        %77 = sbr.rel (0) target = $region46
      $region45: #{tpu_custom_call.1} parent=13 // pred_region
        %78 = vsyncadd [#allocation3], 16
      $region46: #{tpu_custom_call.1} parent=13 // pred_fallthru
        _
    $region14: #{tpu_custom_call.1} parent=1 // loop_footer
      %s26 = sadd.s32 1, %s22
    $region15: #{tpu_custom_call.1} parent=1 // loop_footer_branch
      %21 = sbr.rel target = $region11
    $region16: #{tpu_custom_call.1} parent=1 // loop_exit
      _
    loop: start=0, step=1, limit=16
    $region47: #{tpu_custom_call.1} parent=1 // loop_pre_header
      _
    $region48: #{tpu_custom_call.1} parent=1 // loop_header
      %s80 = sphi 0, %s84
      %p81 = scmp.ge.s32.totalorder %s80, 16
    $region49: #{tpu_custom_call.1} parent=1 // loop_header_branch
      %83 = sbr.rel (%p81) target = $region53
    $region50: #{tpu_custom_call.1} parent=1 // loop_body
      %s85 = smul.u32 1, 1
      %s86 = sshll.u32 %s85, 4
      %87 = dma.done [#allocation3], %s86
    $region51: #{tpu_custom_call.1} parent=1 // loop_footer
      %s84 = sadd.s32 1, %s80
    $region52: #{tpu_custom_call.1} parent=1 // loop_footer_branch
      %79 = sbr.rel target = $region48
    $region53: #{tpu_custom_call.1} parent=1 // loop_exit
      _
    %v88 = vld [vmem:[#allocation2] sm:$0xff]
    %v89 = vld [vmem:[#allocation2 + $0x8] sm:$0xff]
    %v90 = vld [vmem:[%s2] sm:$0xff]
    %v91 = vld [vmem:[%s2 + $0x8] sm:$0xff]
    %v92 = vld [vmem:[%s2 + $0x10] sm:$0xff]
    %v93 = vld [vmem:[%s2 + $0x18] sm:$0xff]
    %v94 = vld [vmem:[%s3] sm:$0x1]
    %v96 = vlaneseq
    %v97 = vshrl.u32 %v96, 7
    %v98 = vsub.s32 0, %v97
    %v99 = vrot.slane %v94, %v98
    %vm101 = vcmask 261120
    %v103 = vsel %vm101, %v88, 0
    %v106 = vsel %vm101, %v89, 0
    %108 = vmatprep.subr.mxu0 0.0
    %109 = vmatpush1.msra.mxu0 %v90
    %110 = vmatprep.subr.mxu0 0.0
    %111 = vmatpush1.msra.mxu0 %v91
    %112 = vmatprep.subr.mxu0 0.0
    %113 = vmatpush1.msra.mxu0 %v92
    %114 = vmatprep.subr.mxu0 0.0
    %115 = vmatpush1.msra.mxu0 %v93
    %116 = vmatprep.subr.mxu0 0.0
    %117 = vmatpush1.msra.mxu0 0.0
    %118 = vmatprep.subr.mxu0 0.0
    %119 = vmatpush1.msra.mxu0 0.0
    %120 = vmatprep.subr.mxu0 0.0
    %121 = vmatpush1.msra.mxu0 0.0
    %122 = vmatprep.subr.mxu0 0.0
    %123 = vmatpush1.msra.mxu0 0.0
    %124 = vmatprep.subr.mxu0 0.0
    %125 = vmatpush1.msra.mxu0 0.0
    %126 = vmatprep.subr.mxu0 0.0
    %127 = vmatpush1.msra.mxu0 0.0
    %128 = vmatprep.subr.mxu0 0.0
    %129 = vmatpush1.msra.mxu0 0.0
    %130 = vmatprep.subr.mxu0 0.0
    %131 = vmatpush1.msra.mxu0 0.0
    %132 = vmatprep.subr.mxu0 0.0
    %133 = vmatpush1.msra.mxu0 0.0
    %134 = vmatprep.subr.mxu0 0.0
    %135 = vmatpush1.msra.mxu0 0.0
    %136 = vmatprep.subr.mxu0 0.0
    %137 = vmatpush1.msra.mxu0 0.0
    %138 = vmatprep.subr.mxu0 0.0
    %139 = vmatpush1.msra.mxu0 0.0
    %140 = vmatprep.subr.mxu0 0.0
    %141 = vmatpush1.msra.mxu0 0.0
    %142 = vmatprep.subr.mxu0 0.0
    %143 = vmatpush1.msra.mxu0 0.0
    %144 = vmatprep.subr.mxu0 0.0
    %145 = vmatpush1.msra.mxu0 0.0
    %146 = vmatprep.subr.mxu0 0.0
    %147 = vmatpush1.msra.mxu0 0.0
    %148 = vmatprep.subr.mxu0 0.0
    %149 = vmatpush1.msra.mxu0 0.0
    %150 = vmatprep.subr.mxu0 0.0
    %151 = vmatpush1.msra.mxu0 0.0
    %152 = vmatprep.subr.mxu0 0.0
    %153 = vmatpush1.msra.mxu0 0.0
    %154 = vmatprep.subr.mxu0 0.0
    %155 = vmatpush1.msra.mxu0 0.0
    %156 = vmatprep.subr.mxu0 0.0
    %157 = vmatpush1.msra.mxu0 0.0
    %158 = vmatprep.subr.mxu0 0.0
    %159 = vmatpush1.msra.mxu0 0.0
    %160 = vmatprep.subr.mxu0 0.0
    %161 = vmatpush1.msra.mxu0 0.0
    %162 = vmatprep.subr.mxu0 0.0
    %163 = vmatpush1.msra.mxu0 0.0
    %164 = vmatprep.subr.mxu0 0.0
    %165 = vmatpush1.msra.mxu0 0.0
    %166 = vmatprep.subr.mxu0 0.0
    %167 = vmatpush1.msra.mxu0 0.0
    %168 = vmatprep.subr.mxu0 0.0
    %169 = vmatpush1.msra.mxu0 0.0
    %170 = vmatprep.subr.mxu0 0.0
    %171 = vmatpush1.msra.mxu0 0.0
    %172 = vmatprep.mubr.f32.mxu0 0.0
    %173 = vmatmul.mubr.f32.gmra.mrb[0].mxu0 %v103
    %v174 = vpop.f32.mrb[0].mxu0
    %v175 = vadd.f32 %v99, %v174
    %v176 = vpop.f32.mrb[0].mxu0
    %177 = vmatprep.mubr.f32.mxu0 0.0
    %178 = vmatmul.mubr.f32.gmra.mrb[0].mxu0 %v106
    %v179 = vpop.f32.mrb[0].mxu0
    %v180 = vadd.f32 %v99, %v179
    %v181 = vpop.f32.mrb[0].mxu0
    %182 = vdwg.mxu0
    %183 = vst [vmem:[#allocation6] sm:$0xff] %v175
    %184 = vst [vmem:[#allocation6 + $0x8] sm:$0xff] %v180
    // Predicated region
    $region54: #{tpu_custom_call.1} parent=1 // pred_check
      _
    $region55: #{tpu_custom_call.1} parent=1 // pred_check_branch
      %186 = sbr.rel (0) target = $region57
    $region56: #{tpu_custom_call.1} parent=1 // pred_region
      %s188 = ssub.s32 256, 256
      %189 = vsyncadd [#allocation7], %s188
      %s190 = sshll.u32 [#allocation6], 4
      %s191 = int_to_ptr.vmem [resolvable:$true] %s190
      %196 = dma.vmem_to_hbm [thread:$0]  %s191, 256, %s4, [#allocation7], 128, 128, 8
    $region57: #{tpu_custom_call.1} parent=1 // pred_fallthru
      _
    // Predicated region
    $region58: #{tpu_custom_call.1} parent=1 // pred_check
      _
    $region59: #{tpu_custom_call.1} parent=1 // pred_check_branch
      %198 = sbr.rel (0) target = $region61
    $region60: #{tpu_custom_call.1} parent=1 // pred_region
      %199 = dma.done [#allocation7], 256
    $region61: #{tpu_custom_call.1} parent=1 // pred_fallthru
      _
    %200 = vsyncpa [#allocation7], 1
  %201 = vsyncmov [#allocation3]
  %s202 = vpop.sfrf %201
  %p203 = scmp.eq.s32.totalorder %s202, 0
  %p204 = pneg %p203
  %206 = shalt.err (%p204)

</llo_original>
